<compile_context>
chip_gen: v5e
topology: v5e:2x2
jax: 0.10.0
libtpu: 0.0.40
codegen_flags: <defaults>
</compile_context>

<pallas_src>
from functools import partial

import numpy as np
import jax
import jax.numpy as jnp
from jax.experimental import pallas as pl
from jax.experimental.pallas import tpu as pltpu

N_GATES = 4  # forget / input / update / output VQCs


# ----------------------------------------------------------------------------
# Host-side: exact classical statevector algebra for the constant circuit part.
# Convention: wire i <-> bit i of the basis index (little-endian).
# ----------------------------------------------------------------------------
def _rot_x(theta):
    c, s = np.cos(theta / 2.0), np.sin(theta / 2.0)
    return np.array([[c, -1j * s], [-1j * s, c]], dtype=np.complex128)


def _rot_y(theta):
    c, s = np.cos(theta / 2.0), np.sin(theta / 2.0)
    return np.array([[c, -s], [s, c]], dtype=np.complex128)


def _op_on_wire(gate, wire, n):
    op = np.array([[1.0 + 0j]])
    for q in range(n - 1, -1, -1):  # most significant bit first
        op = np.kron(op, gate if q == wire else np.eye(2, dtype=np.complex128))
    return op


def _cnot(control, target, n):
    d = 2 ** n
    m = np.zeros((d, d), dtype=np.complex128)
    for k in range(d):
        if (k >> control) & 1:
            m[k ^ (1 << target), k] = 1.0
        else:
            m[k, k] = 1.0
    return m


def _basic_entangler_unitary(weights, n, rotation="X"):
    """PennyLane BasicEntanglerLayers unitary (per-layer rotations + CNOT ring)."""
    d = 2 ** n
    u = np.eye(d, dtype=np.complex128)
    rot = _rot_y if rotation == "Y" else _rot_x
    for layer in range(weights.shape[0]):
        for i in range(n):
            u = _op_on_wire(rot(weights[layer, i]), i, n) @ u
        if n == 2:
            pairs = [(0, 1)]
        elif n > 2:
            pairs = [(i, (i + 1) % n) for i in range(n)]
        else:
            pairs = []
        for c, t in pairs:
            u = _cnot(c, t, n) @ u
    return u


def _phase_folded_observables(weights, n, rotation="X"):
    """A[:, w*d:(w+1)*d] = Re(P^dag U^dag Z_w U P)^T, P = diag((-i)^popcount(k)).

    Folding the constant RX-embedding phase P makes the embedded state a real
    magnitude vector, so the kernel needs only real matmuls."""
    d = 2 ** n
    u = _basic_entangler_unitary(weights, n, rotation)
    phase = np.array([(-1j) ** bin(k).count("1") for k in range(d)])
    a = np.zeros((d, n * d), dtype=np.float32)
    for w in range(n):
        zdiag = np.array([1.0 - 2.0 * ((k >> w) & 1) for k in range(d)],
                         dtype=np.complex128)
        o = u.conj().T @ np.diag(zdiag) @ u
        o = np.conj(phase)[:, None] * o * phase[None, :]        # P^dag O P
        a[:, w * d:(w + 1) * d] = np.real(o).T.astype(np.float32)
    return a


def build_params(wcx, wch, bc, wout, bout, vqc_weights, n_qubits,
                 matmul_dtype=jnp.bfloat16):
    """Precompute all constant matrices used by the kernel (host side).

    matmul_dtype: dtype for the two big (256-wide) matmul operands a_all/w_big
    (bf16 default per perf review; f32 for exact-precision verification)."""
    dim = 2 ** n_qubits
    wout_np = np.asarray(wout, np.float32)          # (n_qubits, hidden)
    hidden = wout_np.shape[1]
    width = N_GATES * n_qubits * dim

    # Gate order mirrors the torch code: ingate<-'forget', forgetgate<-'input',
    # cellgate<-'update', outgate<-'output'.
    gate_specs = (("forget", "X"), ("input", "Y"), ("update", "X"), ("output", "X"))

    a_all = np.zeros((width, width), np.float32)             # block-diag observables
    w_big = np.zeros((width, N_GATES * hidden), np.float32)  # segmented-sum @ clayer_out
    for g, (name, rot) in enumerate(gate_specs):
        blk = _phase_folded_observables(np.asarray(vqc_weights[name], np.float64),
                                        n_qubits, rot)
        for w in range(n_qubits):
            s = (g * n_qubits + w) * dim
            a_all[s:s + dim, s:s + dim] = blk[:, w * dim:(w + 1) * dim]
            w_big[s:s + dim, g * hidden:(g + 1) * hidden] = wout_np[w][None, :]
    b_big = np.tile(np.asarray(bout, np.float32).reshape(1, hidden), (1, N_GATES))

    # Per-qubit lane bit selectors (host-precomputed; replaces in-kernel iota).
    lane = np.arange(width, dtype=np.int64) & (dim - 1)
    bit_sel = np.stack([((lane >> i) & 1).astype(np.float32)
                        for i in range(n_qubits)], axis=0)     # (n_qubits, width)

    return dict(
        wcx=jnp.asarray(np.asarray(wcx, np.float32)),          # (in, n_qubits)
        wch=jnp.asarray(np.asarray(wch, np.float32)),          # (hidden, n_qubits)
        bc=jnp.asarray(np.asarray(bc, np.float32).reshape(1, n_qubits)),
        bit_sel=jnp.asarray(bit_sel),
        a_all=jnp.asarray(a_all, dtype=matmul_dtype),
        w_big=jnp.asarray(w_big, dtype=matmul_dtype),
        b_big=jnp.asarray(b_big),
    )


# ----------------------------------------------------------------------------
# Kernel math (values in, values out — no refs).
# ----------------------------------------------------------------------------
def _cell_math(theta, cx, bit_sel, a_all, w_big, b_big, n_qubits, hidden):
    f32 = jnp.float32
    half = theta * 0.5
    cth = jnp.cos(half)                    # (B, n_qubits) — single EUP push each
    sth = jnp.sin(half)

    # RX AngleEmbedding magnitudes at width = 4*n_qubits*2^n (lane c encodes
    # basis state c & (dim-1)); bit masks are precomputed constants.
    mag = None
    for i in range(n_qubits):
        ci = cth[:, i:i + 1]
        si = sth[:, i:i + 1]
        term = ci + bit_sel[i:i + 1, :] * (si - ci)            # (B, width)
        mag = term if mag is None else mag * term

    # <psi|O_w|psi> for all 4 gates x n_qubits wires, fused with clayer_out:
    # two lane-dense MXU matmuls (bf16/f32 inputs, f32 accumulate) + one VPU mul.
    mdt = a_all.dtype
    t = jnp.dot(mag.astype(mdt), a_all, preferred_element_type=f32)          # (B, width)
    preact = jnp.dot((mag * t).astype(mdt), w_big, preferred_element_type=f32) + b_big

    def sigmoid(z):
        return pl.reciprocal(1.0 + jnp.exp(-z), approx=True)

    H = hidden
    # Names mirror the torch code exactly (intentional VQC-name/gate swap kept).
    ingate = sigmoid(preact[:, 0 * H:1 * H])
    forgetgate = sigmoid(preact[:, 1 * H:2 * H])
    cellgate = jnp.tanh(preact[:, 2 * H:3 * H])
    outgate = sigmoid(preact[:, 3 * H:4 * H])

    cy = cx * forgetgate + ingate * cellgate
    hy = outgate * jnp.tanh(cy)
    return hy, cy


def _make_seq_kernel(n_qubits, hidden, tb, b_sz):
    """Time-blocked kernel: tb cell steps per grid iteration (statically unrolled)."""
    H = hidden

    def kernel(x_ref, h0_ref, c0_ref, wcx_ref, wch_ref, bc_ref, bit_ref,
               a_ref, wbig_ref, bbig_ref, out_ref, h_sc, c_sc):
        f32 = jnp.float32

        @pl.when(pl.program_id(0) == 0)
        def _():
            h_sc[...] = h0_ref[...]
            c_sc[...] = c0_ref[...]

        # Grid-invariant constants read once per grid step.
        bit_sel = bit_ref[...]
        a_all = a_ref[...]
        w_big = wbig_ref[...]
        b_big = bbig_ref[...]
        wch = wch_ref[...]

        # Hoisted x-projection + bias for the whole time block: one MXU matmul
        # with M = tb*B rows; only hx @ Wch stays on the serial critical path.
        theta_x = (jnp.dot(x_ref[...], wcx_ref[...], preferred_element_type=f32)
                   + bc_ref[...])                               # (tb*B, n_qubits)

        hx = h_sc[...]
        cx = c_sc[...]
        for t in range(tb):  # static unroll (short fixed trip count)
            theta = theta_x[t * b_sz:(t + 1) * b_sz, :] + jnp.dot(
                hx, wch, preferred_element_type=f32)
            hx, cx = _cell_math(theta, cx, bit_sel, a_all, w_big, b_big,
                                n_qubits, H)
            # Direct sub-slice stores into the lane-dense (B, tb*2H) out block
            # (no jnp.concatenate); HBM writeback is one 512-lane block/grid step.
            out_ref[0, :, (2 * t) * H:(2 * t + 1) * H] = hx
            out_ref[0, :, (2 * t + 1) * H:(2 * t + 2) * H] = cx
        h_sc[...] = hx
        c_sc[...] = cx

    return kernel


# ----------------------------------------------------------------------------
# Wrappers
# ----------------------------------------------------------------------------
def _replicated_spec(arr):
    nd = arr.ndim
    return pl.BlockSpec(arr.shape, lambda i, _nd=nd: (0,) * _nd)


@partial(jax.jit, static_argnames=("time_block",))
def qlstm_sequence_forward(x_seq, h0, c0, params, time_block=8):
    """T QLSTMCell steps fused into ONE pallas_call; grid over blocks of
    `time_block` steps, hx/cx carried in VMEM scratch, weights resident."""
    T, b_sz, in_sz = x_seq.shape
    hidden = params["w_big"].shape[1] // N_GATES
    n_qubits = params["bc"].shape[1]

    tb = 1
    for d in (time_block, 8, 4, 2):
        if 1 <= d <= T and T % d == 0:
            tb = d
            break
    n_blk = T // tb

    x2d = jnp.asarray(x_seq, jnp.float32).reshape(T * b_sz, in_sz)
    inputs = (x2d, jnp.asarray(h0, jnp.float32), jnp.asarray(c0, jnp.float32),
              params["wcx"], params["wch"], params["bc"], params["bit_sel"],
              params["a_all"], params["w_big"], params["b_big"])
    in_specs = [pl.BlockSpec((tb * b_sz, in_sz), lambda i: (i, 0))]
    in_specs += [_replicated_spec(a) for a in inputs[1:]]

    # NOTE(v7x): the time recurrence is serial; a "parallel" batch grid axis
    # would let the 2nd TensorCore help once B >= 16 (B=8 here, so omitted).
    slab = pl.pallas_call(
        _make_seq_kernel(n_qubits, hidden, tb, b_sz),
        out_shape=jax.ShapeDtypeStruct((n_blk, b_sz, tb * 2 * hidden), jnp.float32),
        grid=(n_blk,),
        in_specs=in_specs,
        out_specs=pl.BlockSpec((1, b_sz, tb * 2 * hidden), lambda i: (i, 0, 0)),
        scratch_shapes=[pltpu.VMEM((b_sz, hidden), jnp.float32),
                        pltpu.VMEM((b_sz, hidden), jnp.float32)],
        compiler_params=pltpu.CompilerParams(dimension_semantics=("arbitrary",)),
    )(*inputs)

    # Wrapper-side layout plumbing: (n_blk, B, tb*2H) -> (T, B, 2H) -> hy, cy.
    slab = slab.reshape(n_blk, b_sz, tb, 2 * hidden)
    slab = jnp.transpose(slab, (0, 2, 1, 3)).reshape(T, b_sz, 2 * hidden)
    return slab[:, :, :hidden], slab[:, :, hidden:]


def qlstm_cell_forward(x, hx, cx, params):
    """Single QLSTMCell.forward step (matches the torch module): routes through
    the fused sequence kernel with T=1 (no host-side concat of x and hx)."""
    hy_seq, cy_seq = qlstm_sequence_forward(x[None], hx, cx, params)
    return hy_seq[0], cy_seq[0]


# ----------------------------------------------------------------------------
# Pure-numpy reference (full complex statevector simulation of every circuit)
# ----------------------------------------------------------------------------
def reference_forward(x, hx, cx, wcx, wch, bc, wout, bout, vqc_weights, n_qubits):
    gates = x @ wcx + hx @ wch + bc
    b_sz = x.shape[0]
    d = 2 ** n_qubits

    def run_vqc(weights, rotation):
        u = _basic_entangler_unitary(weights, n_qubits, rotation)
        out = np.zeros((b_sz, n_qubits))
        for b in range(b_sz):
            psi = np.array([1.0 + 0j])
            for i in range(n_qubits - 1, -1, -1):
                th = gates[b, i]
                psi = np.kron(psi, np.array([np.cos(th / 2), -1j * np.sin(th / 2)]))
            po = u @ psi
            for w in range(n_qubits):
                zd = 1.0 - 2.0 * (((np.arange(d) >> w) & 1).astype(np.float64))
                out[b, w] = np.real(np.sum(np.conj(po) * zd * po))
        return out

    def sig(z):
        return 1.0 / (1.0 + np.exp(-z))

    ingate = sig(run_vqc(vqc_weights["forget"], "X") @ wout + bout)
    forgetgate = sig(run_vqc(vqc_weights["input"], "Y") @ wout + bout)
    cellgate = np.tanh(run_vqc(vqc_weights["update"], "X") @ wout + bout)
    outgate = sig(run_vqc(vqc_weights["output"], "X") @ wout + bout)
    cy = cx * forgetgate + ingate * cellgate
    hy = outgate * np.tanh(cy)
    return hy, cy


# ----------------------------------------------------------------------------
if __name__ == "__main__":
    B, INPUT_SIZE, HIDDEN_SIZE, N_QUBITS, N_QLAYERS = 8, 16, 32, 4, 1
    T_SEQ = 16  # -> time_block=8, grid=(2,) : exercises the grid-carried scratch

    key = jax.random.PRNGKey(0)
    keys = jax.random.split(key, 11)

    # Inputs: x, (hx, cx)
    x = jax.random.normal(keys[0], (B, INPUT_SIZE), jnp.float32)
    hx = jax.random.normal(keys[1], (B, HIDDEN_SIZE), jnp.float32)
    cx = jax.random.normal(keys[2], (B, HIDDEN_SIZE), jnp.float32)

    # self.cell = Linear(input+hidden -> n_qubits), xavier_uniform weight, zero bias
    fan_in = INPUT_SIZE + HIDDEN_SIZE
    bound = float(np.sqrt(6.0 / (fan_in + N_QUBITS)))
    w_cell = jax.random.uniform(keys[3], (N_QUBITS, fan_in), jnp.float32, -bound, bound)
    wcx = jnp.transpose(w_cell[:, :INPUT_SIZE])    # (INPUT_SIZE, N_QUBITS)
    wch = jnp.transpose(w_cell[:, INPUT_SIZE:])    # (HIDDEN_SIZE, N_QUBITS)
    bc = jnp.zeros((1, N_QUBITS), jnp.float32)

    # self.clayer_out = Linear(n_qubits -> hidden_size), default torch init
    lim = 1.0 / float(np.sqrt(N_QUBITS))
    w_out_t = jax.random.uniform(keys[4], (HIDDEN_SIZE, N_QUBITS), jnp.float32, -lim, lim)
    b_out = jax.random.uniform(keys[5], (1, HIDDEN_SIZE), jnp.float32, -lim, lim)
    wout = jnp.transpose(w_out_t)                  # (N_QUBITS, HIDDEN_SIZE)

    # VQC weights (TorchLayer default init: U(0, 2*pi)), shape (n_qlayers, n_qubits)
    vqc_w = {}
    for name, kk in zip(("forget", "input", "update", "output"), keys[6:10]):
        vqc_w[name] = np.asarray(
            jax.random.uniform(kk, (N_QLAYERS, N_QUBITS), jnp.float32,
                               0.0, 2.0 * np.pi), dtype=np.float64)

    params_f32 = build_params(wcx, wch, bc, wout, b_out, vqc_w, N_QUBITS,
                              matmul_dtype=jnp.float32)
    params_bf16 = build_params(wcx, wch, bc, wout, b_out, vqc_w, N_QUBITS,
                               matmul_dtype=jnp.bfloat16)

    # --- exact-math (f32) single step vs full complex-statevector reference ---
    hy, cy = qlstm_cell_forward(x, hx, cx, params_f32)
    jax.block_until_ready((hy, cy))
    hy_ref, cy_ref = reference_forward(
        np.asarray(x, np.float64), np.asarray(hx, np.float64),
        np.asarray(cx, np.float64),
        np.asarray(wcx, np.float64), np.asarray(wch, np.float64),
        np.asarray(bc, np.float64),
        np.asarray(wout, np.float64), np.asarray(b_out, np.float64),
        vqc_w, N_QUBITS)
    assert np.max(np.abs(np.asarray(hy) - hy_ref)) < 2e-2, "hy mismatch (f32)"
    assert np.max(np.abs(np.asarray(cy) - cy_ref)) < 2e-2, "cy mismatch (f32)"

    # --- bf16 matmul-weight variant (v5e-oriented); sanity vs the f32 kernel ---
    # (loose tolerance: only guards the dtype cast path against gross errors)
    hy_b, cy_b = qlstm_cell_forward(x, hx, cx, params_bf16)
    jax.block_until_ready((hy_b, cy_b))
    assert np.max(np.abs(np.asarray(hy_b) - np.asarray(hy))) < 1e-1, "hy mismatch (bf16)"
    assert np.max(np.abs(np.asarray(cy_b) - np.asarray(cy))) < 1e-1, "cy mismatch (bf16)"

    # --- time-blocked sequence kernel: T=16 steps, 8 per grid iteration ---
    x_seq = jax.random.normal(keys[10], (T_SEQ, B, INPUT_SIZE), jnp.float32)
    hy_seq, cy_seq = qlstm_sequence_forward(x_seq, hx, cx, params_f32)
    jax.block_until_ready((hy_seq, cy_seq))

    # Consistency vs repeated single-step calls (same math, different launch shape).
    h_it, c_it = hx, cx
    for t in range(T_SEQ):
        h_it, c_it = qlstm_cell_forward(x_seq[t], h_it, c_it, params_f32)
        assert np.max(np.abs(np.asarray(hy_seq[t]) - np.asarray(h_it))) < 1e-3, "seq hy"
        assert np.max(np.abs(np.asarray(cy_seq[t]) - np.asarray(c_it))) < 1e-3, "seq cy"

    # bf16 sequence: run + smoke-check (bf16 rounding accumulates in the recurrence,
    # so tolerances are intentionally loose; strict check is the f32-vs-reference one).
    hy_sb, cy_sb = qlstm_sequence_forward(x_seq, hx, cx, params_bf16)
    jax.block_until_ready((hy_sb, cy_sb))
    assert np.all(np.isfinite(np.asarray(hy_sb))) and np.all(np.isfinite(np.asarray(cy_sb)))
    assert np.max(np.abs(np.asarray(hy_sb) - np.asarray(hy_seq))) < 2e-1, "seq hy (bf16)"
    assert np.max(np.abs(np.asarray(cy_sb) - np.asarray(cy_seq))) < 5e-1, "seq cy (bf16)"

    print("KERNEL_OK")
</pallas_src>

<mosaic_0001>
module attributes {stable_mosaic.version = 11 : i64} {
  func.func @kernel(%arg0: i32, %arg1: memref<8x16xf32, #tpu.memory_space<vmem>>, %arg2: memref<8x32xf32, #tpu.memory_space<vmem>>, %arg3: memref<8x32xf32, #tpu.memory_space<vmem>>, %arg4: memref<16x4xf32, #tpu.memory_space<vmem>>, %arg5: memref<32x4xf32, #tpu.memory_space<vmem>>, %arg6: memref<1x4xf32, #tpu.memory_space<vmem>>, %arg7: memref<4x256xf32, #tpu.memory_space<vmem>>, %arg8: memref<256x256xf32, #tpu.memory_space<vmem>>, %arg9: memref<256x128xf32, #tpu.memory_space<vmem>>, %arg10: memref<1x128xf32, #tpu.memory_space<vmem>>, %arg11: memref<1x8x64xf32, #tpu.memory_space<vmem>>, %arg12: memref<8x32xf32, #tpu.memory_space<vmem>>, %arg13: memref<8x32xf32, #tpu.memory_space<vmem>>) attributes {dimension_semantics = [#tpu.dimension_semantics<arbitrary>], iteration_bounds = array<i64: 1>, scalar_prefetch = 0 : i64, scratch_operands = 2 : i64, tpu.core_type = #tpu.core_type<tc>, window_params = [{transform_indices = @transform_0, window_bounds = array<i64: 8, 16>}, {pipeline_mode = #tpu.pipeline_mode<synchronous>, transform_indices = @transform_1, window_bounds = array<i64: 8, 32>}, {pipeline_mode = #tpu.pipeline_mode<synchronous>, transform_indices = @transform_2, window_bounds = array<i64: 8, 32>}, {pipeline_mode = #tpu.pipeline_mode<synchronous>, transform_indices = @transform_3, window_bounds = array<i64: 16, 4>}, {pipeline_mode = #tpu.pipeline_mode<synchronous>, transform_indices = @transform_4, window_bounds = array<i64: 32, 4>}, {pipeline_mode = #tpu.pipeline_mode<synchronous>, transform_indices = @transform_5, window_bounds = array<i64: 1, 4>}, {pipeline_mode = #tpu.pipeline_mode<synchronous>, transform_indices = @transform_6, window_bounds = array<i64: 4, 256>}, {pipeline_mode = #tpu.pipeline_mode<synchronous>, transform_indices = @transform_7, window_bounds = array<i64: 256, 256>}, {pipeline_mode = #tpu.pipeline_mode<synchronous>, transform_indices = @transform_8, window_bounds = array<i64: 256, 128>}, {pipeline_mode = #tpu.pipeline_mode<synchronous>, transform_indices = @transform_9, window_bounds = array<i64: 1, 128>}, {transform_indices = @transform_10, window_bounds = array<i64: 1, 8, 64>}]} {
    %c0_i32 = arith.constant 0 : i32
    %0 = arith.cmpi eq, %arg0, %c0_i32 : i32
    %1 = arith.extui %0 : i1 to i32
    %c0_i32_0 = arith.constant 0 : i32
    %2 = arith.cmpi ne, %1, %c0_i32_0 : i32
    scf.if %2 {
      %c0_39 = arith.constant 0 : index
      %c0_40 = arith.constant 0 : index
      %102 = vector.load %arg2[%c0_39, %c0_40] : memref<8x32xf32, #tpu.memory_space<vmem>>, vector<8x32xf32>
      %c0_41 = arith.constant 0 : index
      %c0_42 = arith.constant 0 : index
      %103 = vector.load %arg12[%c0_41, %c0_42] : memref<8x32xf32, #tpu.memory_space<vmem>>, vector<8x32xf32>
      tpu.vector_store %arg12[%c0_41, %c0_42], %102 {strides = array<i32>} : memref<8x32xf32, #tpu.memory_space<vmem>>, vector<8x32xf32>,
      %c0_43 = arith.constant 0 : index
      %c0_44 = arith.constant 0 : index
      %104 = vector.load %arg3[%c0_43, %c0_44] : memref<8x32xf32, #tpu.memory_space<vmem>>, vector<8x32xf32>
      %c0_45 = arith.constant 0 : index
      %c0_46 = arith.constant 0 : index
      %105 = vector.load %arg13[%c0_45, %c0_46] : memref<8x32xf32, #tpu.memory_space<vmem>>, vector<8x32xf32>
      tpu.vector_store %arg13[%c0_45, %c0_46], %104 {strides = array<i32>} : memref<8x32xf32, #tpu.memory_space<vmem>>, vector<8x32xf32>,
    } else {
    }
    %c0 = arith.constant 0 : index
    %c0_1 = arith.constant 0 : index
    %3 = vector.load %arg7[%c0, %c0_1] : memref<4x256xf32, #tpu.memory_space<vmem>>, vector<4x256xf32>
    %c0_2 = arith.constant 0 : index
    %c0_3 = arith.constant 0 : index
    %4 = vector.load %arg8[%c0_2, %c0_3] : memref<256x256xf32, #tpu.memory_space<vmem>>, vector<256x256xf32>
    %c0_4 = arith.constant 0 : index
    %c0_5 = arith.constant 0 : index
    %5 = vector.load %arg9[%c0_4, %c0_5] : memref<256x128xf32, #tpu.memory_space<vmem>>, vector<256x128xf32>
    %c0_6 = arith.constant 0 : index
    %c0_7 = arith.constant 0 : index
    %6 = vector.load %arg10[%c0_6, %c0_7] : memref<1x128xf32, #tpu.memory_space<vmem>>, vector<1x128xf32>
    %c0_8 = arith.constant 0 : index
    %c0_9 = arith.constant 0 : index
    %7 = vector.load %arg5[%c0_8, %c0_9] : memref<32x4xf32, #tpu.memory_space<vmem>>, vector<32x4xf32>
    %c0_10 = arith.constant 0 : index
    %c0_11 = arith.constant 0 : index
    %8 = vector.load %arg1[%c0_10, %c0_11] : memref<8x16xf32, #tpu.memory_space<vmem>>, vector<8x16xf32>
    %c0_12 = arith.constant 0 : index
    %c0_13 = arith.constant 0 : index
    %9 = vector.load %arg4[%c0_12, %c0_13] : memref<16x4xf32, #tpu.memory_space<vmem>>, vector<16x4xf32>
    %cst = arith.constant dense<0.000000e+00> : vector<8x4xf32>
    %10 = tpu.matmul %8, %9, %cst {dimension_numbers = #tpu.dot_dimension_numbers<[1], [0], [0], [1], [0, 0, 1, 1], [], []>} : vector<8x16xf32>, vector<16x4xf32>, vector<8x4xf32> -> vector<8x4xf32>
    %c0_14 = arith.constant 0 : index
    %c0_15 = arith.constant 0 : index
    %11 = vector.load %arg6[%c0_14, %c0_15] : memref<1x4xf32, #tpu.memory_space<vmem>>, vector<1x4xf32>
    %12 = vector.broadcast %11 : vector<1x4xf32> to vector<8x4xf32>
    %13 = arith.addf %10, %12 : vector<8x4xf32>
    %c0_16 = arith.constant 0 : index
    %c0_17 = arith.constant 0 : index
    %14 = vector.load %arg12[%c0_16, %c0_17] : memref<8x32xf32, #tpu.memory_space<vmem>>, vector<8x32xf32>
    %c0_18 = arith.constant 0 : index
    %c0_19 = arith.constant 0 : index
    %15 = vector.load %arg13[%c0_18, %c0_19] : memref<8x32xf32, #tpu.memory_space<vmem>>, vector<8x32xf32>
    %cst_20 = arith.constant dense<0.000000e+00> : vector<8x4xf32>
    %16 = tpu.matmul %14, %7, %cst_20 {dimension_numbers = #tpu.dot_dimension_numbers<[1], [0], [0], [1], [0, 0, 1, 1], [], []>} : vector<8x32xf32>, vector<32x4xf32>, vector<8x4xf32> -> vector<8x4xf32>
    %17 = arith.addf %13, %16 : vector<8x4xf32>
    %cst_21 = arith.constant 5.000000e-01 : f32
    %18 = vector.broadcast %cst_21 : f32 to vector<8x4xf32>
    %19 = arith.mulf %17, %18 : vector<8x4xf32>
    %20 = math.cos %19 : vector<8x4xf32>
    %21 = math.sin %19 : vector<8x4xf32>
    %22 = vector.extract_strided_slice %20 {offsets = [0, 0], sizes = [8, 1], strides = [1, 1]} : vector<8x4xf32> to vector<8x1xf32>
    %23 = vector.extract_strided_slice %21 {offsets = [0, 0], sizes = [8, 1], strides = [1, 1]} : vector<8x4xf32> to vector<8x1xf32>
    %24 = vector.extract_strided_slice %3 {offsets = [0, 0], sizes = [1, 256], strides = [1, 1]} : vector<4x256xf32> to vector<1x256xf32>
    %25 = arith.subf %23, %22 : vector<8x1xf32>
    %26 = vector.broadcast %24 : vector<1x256xf32> to vector<8x256xf32>
    %27 = vector.broadcast %25 : vector<8x1xf32> to vector<8x256xf32>
    %28 = arith.mulf %26, %27 : vector<8x256xf32>
    %29 = vector.broadcast %22 : vector<8x1xf32> to vector<8x256xf32>
    %30 = arith.addf %29, %28 : vector<8x256xf32>
    %31 = vector.extract_strided_slice %20 {offsets = [0, 1], sizes = [8, 1], strides = [1, 1]} : vector<8x4xf32> to vector<8x1xf32>
    %32 = vector.extract_strided_slice %21 {offsets = [0, 1], sizes = [8, 1], strides = [1, 1]} : vector<8x4xf32> to vector<8x1xf32>
    %33 = vector.extract_strided_slice %3 {offsets = [1, 0], sizes = [1, 256], strides = [1, 1]} : vector<4x256xf32> to vector<1x256xf32>
    %34 = arith.subf %32, %31 : vector<8x1xf32>
    %35 = vector.broadcast %33 : vector<1x256xf32> to vector<8x256xf32>
    %36 = vector.broadcast %34 : vector<8x1xf32> to vector<8x256xf32>
    %37 = arith.mulf %35, %36 : vector<8x256xf32>
    %38 = vector.broadcast %31 : vector<8x1xf32> to vector<8x256xf32>
    %39 = arith.addf %38, %37 : vector<8x256xf32>
    %40 = arith.mulf %30, %39 : vector<8x256xf32>
    %41 = vector.extract_strided_slice %20 {offsets = [0, 2], sizes = [8, 1], strides = [1, 1]} : vector<8x4xf32> to vector<8x1xf32>
    %42 = vector.extract_strided_slice %21 {offsets = [0, 2], sizes = [8, 1], strides = [1, 1]} : vector<8x4xf32> to vector<8x1xf32>
    %43 = vector.extract_strided_slice %3 {offsets = [2, 0], sizes = [1, 256], strides = [1, 1]} : vector<4x256xf32> to vector<1x256xf32>
    %44 = arith.subf %42, %41 : vector<8x1xf32>
    %45 = vector.broadcast %43 : vector<1x256xf32> to vector<8x256xf32>
    %46 = vector.broadcast %44 : vector<8x1xf32> to vector<8x256xf32>
    %47 = arith.mulf %45, %46 : vector<8x256xf32>
    %48 = vector.broadcast %41 : vector<8x1xf32> to vector<8x256xf32>
    %49 = arith.addf %48, %47 : vector<8x256xf32>
    %50 = arith.mulf %40, %49 : vector<8x256xf32>
    %51 = vector.extract_strided_slice %20 {offsets = [0, 3], sizes = [8, 1], strides = [1, 1]} : vector<8x4xf32> to vector<8x1xf32>
    %52 = vector.extract_strided_slice %21 {offsets = [0, 3], sizes = [8, 1], strides = [1, 1]} : vector<8x4xf32> to vector<8x1xf32>
    %53 = vector.extract_strided_slice %3 {offsets = [3, 0], sizes = [1, 256], strides = [1, 1]} : vector<4x256xf32> to vector<1x256xf32>
    %54 = arith.subf %52, %51 : vector<8x1xf32>
    %55 = vector.broadcast %53 : vector<1x256xf32> to vector<8x256xf32>
    %56 = vector.broadcast %54 : vector<8x1xf32> to vector<8x256xf32>
    %57 = arith.mulf %55, %56 : vector<8x256xf32>
    %58 = vector.broadcast %51 : vector<8x1xf32> to vector<8x256xf32>
    %59 = arith.addf %58, %57 : vector<8x256xf32>
    %60 = arith.mulf %50, %59 : vector<8x256xf32>
    %cst_22 = arith.constant dense<0.000000e+00> : vector<8x256xf32>
    %61 = tpu.matmul %60, %4, %cst_22 {dimension_numbers = #tpu.dot_dimension_numbers<[1], [0], [0], [1], [0, 0, 1, 1], [], []>} : vector<8x256xf32>, vector<256x256xf32>, vector<8x256xf32> -> vector<8x256xf32>
    %62 = arith.mulf %60, %61 : vector<8x256xf32>
    %cst_23 = arith.constant dense<0.000000e+00> : vector<8x128xf32>
    %63 = tpu.matmul %62, %5, %cst_23 {dimension_numbers = #tpu.dot_dimension_numbers<[1], [0], [0], [1], [0, 0, 1, 1], [], []>} : vector<8x256xf32>, vector<256x128xf32>, vector<8x128xf32> -> vector<8x128xf32>
    %64 = vector.broadcast %6 : vector<1x128xf32> to vector<8x128xf32>
    %65 = arith.addf %63, %64 : vector<8x128xf32>
    %66 = vector.extract_strided_slice %65 {offsets = [0, 0], sizes = [8, 32], strides = [1, 1]} : vector<8x128xf32> to vector<8x32xf32>
    %cst_24 = arith.constant 0.000000e+00 : f32
    %67 = vector.broadcast %cst_24 : f32 to vector<8x32xf32>
    %68 = arith.subf %67, %66 : vector<8x32xf32>
    %69 = math.exp %68 : vector<8x32xf32>
    %cst_25 = arith.constant 1.000000e+00 : f32
    %70 = vector.broadcast %cst_25 : f32 to vector<8x32xf32>
    %71 = arith.addf %70, %69 : vector<8x32xf32>
    %72 = tpu.reciprocal %71 {approx = true} : vector<8x32xf32> -> vector<8x32xf32>
    %73 = vector.extract_strided_slice %65 {offsets = [0, 32], sizes = [8, 32], strides = [1, 1]} : vector<8x128xf32> to vector<8x32xf32>
    %cst_26 = arith.constant 0.000000e+00 : f32
    %74 = vector.broadcast %cst_26 : f32 to vector<8x32xf32>
    %75 = arith.subf %74, %73 : vector<8x32xf32>
    %76 = math.exp %75 : vector<8x32xf32>
    %cst_27 = arith.constant 1.000000e+00 : f32
    %77 = vector.broadcast %cst_27 : f32 to vector<8x32xf32>
    %78 = arith.addf %77, %76 : vector<8x32xf32>
    %79 = tpu.reciprocal %78 {approx = true} : vector<8x32xf32> -> vector<8x32xf32>
    %80 = vector.extract_strided_slice %65 {offsets = [0, 64], sizes = [8, 32], strides = [1, 1]} : vector<8x128xf32> to vector<8x32xf32>
    %81 = math.tanh %80 : vector<8x32xf32>
    %82 = vector.extract_strided_slice %65 {offsets = [0, 96], sizes = [8, 32], strides = [1, 1]} : vector<8x128xf32> to vector<8x32xf32>
    %cst_28 = arith.constant 0.000000e+00 : f32
    %83 = vector.broadcast %cst_28 : f32 to vector<8x32xf32>
    %84 = arith.subf %83, %82 : vector<8x32xf32>
    %85 = math.exp %84 : vector<8x32xf32>
    %cst_29 = arith.constant 1.000000e+00 : f32
    %86 = vector.broadcast %cst_29 : f32 to vector<8x32xf32>
    %87 = arith.addf %86, %85 : vector<8x32xf32>
    %88 = tpu.reciprocal %87 {approx = true} : vector<8x32xf32> -> vector<8x32xf32>
    %89 = arith.mulf %15, %79 : vector<8x32xf32>
    %90 = arith.mulf %72, %81 : vector<8x32xf32>
    %91 = arith.addf %89, %90 : vector<8x32xf32>
    %92 = math.tanh %91 : vector<8x32xf32>
    %93 = arith.mulf %88, %92 : vector<8x32xf32>
    %c0_30 = arith.constant 0 : index
    %c0_31 = arith.constant 0 : index
    %c0_32 = arith.constant 0 : index
    %94 = vector.load %arg11[%c0_30, %c0_31, %c0_32] : memref<1x8x64xf32, #tpu.memory_space<vmem>>, vector<1x8x32xf32>
    %95 = vector.shape_cast %94 : vector<1x8x32xf32> to vector<8x32xf32>
    %96 = vector.shape_cast %93 : vector<8x32xf32> to vector<1x8x32xf32>
    tpu.vector_store %arg11[%c0_30, %c0_31, %c0_32], %96 {strides = array<i32>} : memref<1x8x64xf32, #tpu.memory_space<vmem>>, vector<1x8x32xf32>,
    %c0_33 = arith.constant 0 : index
    %c0_34 = arith.constant 0 : index
    %c32 = arith.constant 32 : index
    %97 = vector.load %arg11[%c0_33, %c0_34, %c32] : memref<1x8x64xf32, #tpu.memory_space<vmem>>, vector<1x8x32xf32>
    %98 = vector.shape_cast %97 : vector<1x8x32xf32> to vector<8x32xf32>
    %99 = vector.shape_cast %91 : vector<8x32xf32> to vector<1x8x32xf32>
    tpu.vector_store %arg11[%c0_33, %c0_34, %c32], %99 {strides = array<i32>} : memref<1x8x64xf32, #tpu.memory_space<vmem>>, vector<1x8x32xf32>,
    %c0_35 = arith.constant 0 : index
    %c0_36 = arith.constant 0 : index
    %100 = vector.load %arg12[%c0_35, %c0_36] : memref<8x32xf32, #tpu.memory_space<vmem>>, vector<8x32xf32>
    tpu.vector_store %arg12[%c0_35, %c0_36], %93 {strides = array<i32>} : memref<8x32xf32, #tpu.memory_space<vmem>>, vector<8x32xf32>,
    %c0_37 = arith.constant 0 : index
    %c0_38 = arith.constant 0 : index
    %101 = vector.load %arg13[%c0_37, %c0_38] : memref<8x32xf32, #tpu.memory_space<vmem>>, vector<8x32xf32>
    tpu.vector_store %arg13[%c0_37, %c0_38], %91 {strides = array<i32>} : memref<8x32xf32, #tpu.memory_space<vmem>>, vector<8x32xf32>,
    return
  }
  func.func @transform_0(%arg0: i32) -> (i32, i32) {
    %c0_i32 = arith.constant 0 : i32
    %c0_i32_0 = arith.constant 0 : i32
    return %arg0, %c0_i32 : i32, i32
  }
  func.func @transform_1(%arg0: i32) -> (i32, i32) {
    %c0_i32 = arith.constant 0 : i32
    %c0_i32_0 = arith.constant 0 : i32
    %c0_i32_1 = arith.constant 0 : i32
    return %c0_i32, %c0_i32_0 : i32, i32
  }
  func.func @transform_2(%arg0: i32) -> (i32, i32) {
    %c0_i32 = arith.constant 0 : i32
    %c0_i32_0 = arith.constant 0 : i32
    %c0_i32_1 = arith.constant 0 : i32
    return %c0_i32, %c0_i32_0 : i32, i32
  }
  func.func @transform_3(%arg0: i32) -> (i32, i32) {
    %c0_i32 = arith.constant 0 : i32
    %c0_i32_0 = arith.constant 0 : i32
    %c0_i32_1 = arith.constant 0 : i32
    return %c0_i32, %c0_i32_0 : i32, i32
  }
  func.func @transform_4(%arg0: i32) -> (i32, i32) {
    %c0_i32 = arith.constant 0 : i32
    %c0_i32_0 = arith.constant 0 : i32
    %c0_i32_1 = arith.constant 0 : i32
    return %c0_i32, %c0_i32_0 : i32, i32
  }
  func.func @transform_5(%arg0: i32) -> (i32, i32) {
    %c0_i32 = arith.constant 0 : i32
    %c0_i32_0 = arith.constant 0 : i32
    %c0_i32_1 = arith.constant 0 : i32
    return %c0_i32, %c0_i32_0 : i32, i32
  }
  func.func @transform_6(%arg0: i32) -> (i32, i32) {
    %c0_i32 = arith.constant 0 : i32
    %c0_i32_0 = arith.constant 0 : i32
    %c0_i32_1 = arith.constant 0 : i32
    return %c0_i32, %c0_i32_0 : i32, i32
  }
  func.func @transform_7(%arg0: i32) -> (i32, i32) {
    %c0_i32 = arith.constant 0 : i32
    %c0_i32_0 = arith.constant 0 : i32
    %c0_i32_1 = arith.constant 0 : i32
    return %c0_i32, %c0_i32_0 : i32, i32
  }
  func.func @transform_8(%arg0: i32) -> (i32, i32) {
    %c0_i32 = arith.constant 0 : i32
    %c0_i32_0 = arith.constant 0 : i32
    %c0_i32_1 = arith.constant 0 : i32
    return %c0_i32, %c0_i32_0 : i32, i32
  }
  func.func @transform_9(%arg0: i32) -> (i32, i32) {
    %c0_i32 = arith.constant 0 : i32
    %c0_i32_0 = arith.constant 0 : i32
    %c0_i32_1 = arith.constant 0 : i32
    return %c0_i32, %c0_i32_0 : i32, i32
  }
  func.func @transform_10(%arg0: i32) -> (i32, i32, i32) {
    %c0_i32 = arith.constant 0 : i32
    %c0_i32_0 = arith.constant 0 : i32
    %c0_i32_1 = arith.constant 0 : i32
    return %arg0, %c0_i32, %c0_i32_0 : i32, i32, i32
  }
}

</mosaic_0001>

<llo_original>
// kernel: qlstm_sequence_forward.1
$region0: #{qlstm_sequence_forward.1}
  #allocation0 [shape = 'u32[]', space=smem, size = 0x4, offset = 0x4, fixed_abs, tag = 'smem constant byte address 0x4 - core index']
  #allocation1 [shape = 'u32[72,128]{1,0:T(1,128)}', space=vmem, size = 0x9000, scoped, tag = 'internal scratch']
  #allocation2 [shape = 'f32[8,32]{1,0:T(8,128)}', space=vmem, size = 0x1000, scoped, tag = 'scratch operand']
  #allocation3 [shape = 'f32[8,32]{1,0:T(8,128)}', space=vmem, size = 0x1000, scoped, tag = 'scratch operand']
  %s0 = inlined_call_operand.vmem [shape: f32[8,16], index: 0, kind: input, shape index: {}]
  %s1 = inlined_call_operand.vmem [shape: f32[8,32], index: 1, kind: input, shape index: {}]
  %s2 = inlined_call_operand.vmem [shape: f32[8,32], index: 2, kind: input, shape index: {}]
  %s3 = inlined_call_operand.vmem [shape: f32[16,4], index: 3, kind: input, shape index: {}]
  %s4 = inlined_call_operand.vmem [shape: f32[32,4], index: 4, kind: input, shape index: {}]
  %s5 = inlined_call_operand.vmem [shape: f32[1,4], index: 5, kind: input, shape index: {}]
  %s6 = inlined_call_operand.vmem [shape: f32[4,256], index: 6, kind: input, shape index: {}]
  %s7 = inlined_call_operand.hbm [shape: f32[256,256], index: 7, kind: input, shape index: {}]
  %s8 = inlined_call_operand.hbm [shape: f32[256,128], index: 8, kind: input, shape index: {}]
  %s9 = inlined_call_operand.vmem [shape: f32[1,128], index: 9, kind: input, shape index: {}]
  %s10 = inlined_call_operand.vmem [shape: f32[1,8,64], index: 10, kind: output, shape index: {}]
  %s11 = sld [smem:[#allocation0]]
  $region62: #{qlstm_sequence_forward.1} parent=0
    _
  %s13 = ssub.s32 1, %s11
  %s14 = scalar_select 0, %s13, %s11
  $region1: #{qlstm_sequence_forward.1} parent=0
    #allocation4 [shape = 'u8[262144]{0}', space=vmem, size = 0x40000, scoped, tag = 'input window, operand 7, single buffered']
    #allocation5 [shape = 's32[1]{0}', space=sflag, size = 0x4, scoped, tag = 'scoped memory for qlstm_sequence_forward.1']
    #allocation6 [shape = 'u8[131072]{0}', space=vmem, size = 0x20000, scoped, tag = 'input window, operand 8, single buffered']
    #allocation7 [shape = 's32[1]{0}', space=sflag, size = 0x4, scoped, tag = 'scoped memory for qlstm_sequence_forward.1']
    %15 = vsyncpa [#allocation5], 0
    %16 = vsyncpa [#allocation7], 0
    // Predicated region
    $region2: #{qlstm_sequence_forward.1} parent=1 // pred_check
      _
    $region3: #{qlstm_sequence_forward.1} parent=1 // pred_check_branch
      %18 = sbr.rel (0) target = $region5
    $region4: #{qlstm_sequence_forward.1} parent=1 // pred_region
      _
    $region5: #{qlstm_sequence_forward.1} parent=1 // pred_fallthru
      _
    // Predicated region
    $region6: #{qlstm_sequence_forward.1} parent=1 // pred_check
      _
    $region7: #{qlstm_sequence_forward.1} parent=1 // pred_check_branch
      %20 = sbr.rel (0) target = $region9
    $region8: #{qlstm_sequence_forward.1} parent=1 // pred_region
      _
    $region9: #{qlstm_sequence_forward.1} parent=1 // pred_fallthru
      _
    // Predicated region
    $region10: #{qlstm_sequence_forward.1} parent=1 // pred_check
      _
    $region11: #{qlstm_sequence_forward.1} parent=1 // pred_check_branch
      %22 = sbr.rel (0) target = $region13
    $region12: #{qlstm_sequence_forward.1} parent=1 // pred_region
      _
    $region13: #{qlstm_sequence_forward.1} parent=1 // pred_fallthru
      _
    // Predicated region
    $region14: #{qlstm_sequence_forward.1} parent=1 // pred_check
      _
    $region15: #{qlstm_sequence_forward.1} parent=1 // pred_check_branch
      %24 = sbr.rel (0) target = $region17
    $region16: #{qlstm_sequence_forward.1} parent=1 // pred_region
      _
    $region17: #{qlstm_sequence_forward.1} parent=1 // pred_fallthru
      _
    // Predicated region
    $region18: #{qlstm_sequence_forward.1} parent=1 // pred_check
      _
    $region19: #{qlstm_sequence_forward.1} parent=1 // pred_check_branch
      %26 = sbr.rel (0) target = $region21
    $region20: #{qlstm_sequence_forward.1} parent=1 // pred_region
      _
    $region21: #{qlstm_sequence_forward.1} parent=1 // pred_fallthru
      _
    // Predicated region
    $region22: #{qlstm_sequence_forward.1} parent=1 // pred_check
      _
    $region23: #{qlstm_sequence_forward.1} parent=1 // pred_check_branch
      %28 = sbr.rel (0) target = $region25
    $region24: #{qlstm_sequence_forward.1} parent=1 // pred_region
      _
    $region25: #{qlstm_sequence_forward.1} parent=1 // pred_fallthru
      _
    // Predicated region
    $region26: #{qlstm_sequence_forward.1} parent=1 // pred_check
      _
    $region27: #{qlstm_sequence_forward.1} parent=1 // pred_check_branch
      %30 = sbr.rel (0) target = $region29
    $region28: #{qlstm_sequence_forward.1} parent=1 // pred_region
      _
    $region29: #{qlstm_sequence_forward.1} parent=1 // pred_fallthru
      _
    // Predicated region
    $region30: #{qlstm_sequence_forward.1} parent=1 // pred_check
      _
    $region31: #{qlstm_sequence_forward.1} parent=1 // pred_check_branch
      %32 = sbr.rel (0) target = $region33
    $region32: #{qlstm_sequence_forward.1} parent=1 // pred_region
      %34 = vsyncadd [#allocation5], 0
      %s35 = sshll.u32 %s7, 4
      %s36 = int_to_ptr.hbm [resolvable:$true] %s35
      %s37 = sshll.u32 [#allocation4], 4
      %s38 = int_to_ptr.vmem [resolvable:$true] %s37
      %43 = dma.hbm_to_vmem [thread:$0]  %s36, 8192, %s38, [#allocation5], 256, 256, 16
    $region33: #{qlstm_sequence_forward.1} parent=1 // pred_fallthru
      _
    // Predicated region
    $region34: #{qlstm_sequence_forward.1} parent=1 // pred_check
      _
    $region35: #{qlstm_sequence_forward.1} parent=1 // pred_check_branch
      %45 = sbr.rel (0) target = $region37
    $region36: #{qlstm_sequence_forward.1} parent=1 // pred_region
      %47 = vsyncadd [#allocation7], 0
      %s48 = sshll.u32 %s8, 4
      %s49 = int_to_ptr.hbm [resolvable:$true] %s48
      %s50 = sshll.u32 [#allocation6], 4
      %s51 = int_to_ptr.vmem [resolvable:$true] %s50
      %56 = dma.hbm_to_vmem [thread:$0]  %s49, 4096, %s51, [#allocation7], 128, 128, 8
    $region37: #{qlstm_sequence_forward.1} parent=1 // pred_fallthru
      _
    // Predicated region
    $region38: #{qlstm_sequence_forward.1} parent=1 // pred_check
      _
    $region39: #{qlstm_sequence_forward.1} parent=1 // pred_check_branch
      %58 = sbr.rel (0) target = $region41
    $region40: #{qlstm_sequence_forward.1} parent=1 // pred_region
      _
    $region41: #{qlstm_sequence_forward.1} parent=1 // pred_fallthru
      _
    // Predicated region
    $region42: #{qlstm_sequence_forward.1} parent=1 // pred_check
      _
    $region43: #{qlstm_sequence_forward.1} parent=1 // pred_check_branch
      %60 = sbr.rel (0) target = $region45
    $region44: #{qlstm_sequence_forward.1} parent=1 // pred_region
      %62 = dma.done [#allocation5], 8192
    $region45: #{qlstm_sequence_forward.1} parent=1 // pred_fallthru
      _
    // Predicated region
    $region46: #{qlstm_sequence_forward.1} parent=1 // pred_check
      _
    $region47: #{qlstm_sequence_forward.1} parent=1 // pred_check_branch
      %64 = sbr.rel (0) target = $region49
    $region48: #{qlstm_sequence_forward.1} parent=1 // pred_region
      %66 = dma.done [#allocation7], 4096
    $region49: #{qlstm_sequence_forward.1} parent=1 // pred_fallthru
      _
    %p67 = scmp.eq.s32.totalorder 0, 0
    // Predicated region
    $region50: #{qlstm_sequence_forward.1} parent=1 // pred_check
      %p68 = pneg %p67
    $region51: #{qlstm_sequence_forward.1} parent=1 // pred_check_branch
      %70 = sbr.rel (%p68) target = $region53
    $region52: #{qlstm_sequence_forward.1} parent=1 // pred_region
      %v71 = vld [vmem:[%s1] sm:$0xff]
      %vm72 = vcmask 261120
      %73 = vst.msk [vmem:[#allocation2] sm:$0xff] %vm72, %v71
      %v74 = vld [vmem:[%s2] sm:$0xff]
      %75 = vst.msk [vmem:[#allocation3] sm:$0xff] %vm72, %v74
    $region53: #{qlstm_sequence_forward.1} parent=1 // pred_fallthru
      _
    %v76 = vld [vmem:[%s6] sm:$0xff]
    %v77 = vld [vmem:[#allocation4] sm:$0xff]
    %v78 = vld [vmem:[#allocation4 + $0x8] sm:$0xff]
    %v79 = vld [vmem:[#allocation4 + $0x10] sm:$0xff]
    %v80 = vld [vmem:[#allocation4 + $0x18] sm:$0xff]
    %v81 = vld [vmem:[#allocation4 + $0x20] sm:$0xff]
    %v82 = vld [vmem:[#allocation4 + $0x28] sm:$0xff]
    %v83 = vld [vmem:[#allocation4 + $0x30] sm:$0xff]
    %v84 = vld [vmem:[#allocation4 + $0x38] sm:$0xff]
    %v85 = vld [vmem:[#allocation4 + $0x40] sm:$0xff]
    %v86 = vld [vmem:[#allocation4 + $0x48] sm:$0xff]
    %v87 = vld [vmem:[#allocation4 + $0x50] sm:$0xff]
    %v88 = vld [vmem:[#allocation4 + $0x58] sm:$0xff]
    %v89 = vld [vmem:[#allocation4 + $0x60] sm:$0xff]
    %v90 = vld [vmem:[#allocation4 + $0x68] sm:$0xff]
    %v91 = vld [vmem:[#allocation4 + $0x70] sm:$0xff]
    %v92 = vld [vmem:[#allocation4 + $0x78] sm:$0xff]
    %v93 = vld [vmem:[#allocation4 + $0x80] sm:$0xff]
    %v94 = vld [vmem:[#allocation4 + $0x88] sm:$0xff]
    %v95 = vld [vmem:[#allocation4 + $0x90] sm:$0xff]
    %v96 = vld [vmem:[#allocation4 + $0x98] sm:$0xff]
    %v97 = vld [vmem:[#allocation4 + $0xa0] sm:$0xff]
    %v98 = vld [vmem:[#allocation4 + $0xa8] sm:$0xff]
    %v99 = vld [vmem:[#allocation4 + $0xb0] sm:$0xff]
    %v100 = vld [vmem:[#allocation4 + $0xb8] sm:$0xff]
    %v101 = vld [vmem:[#allocation4 + $0xc0] sm:$0xff]
    %v102 = vld [vmem:[#allocation4 + $0xc8] sm:$0xff]
    %v103 = vld [vmem:[#allocation4 + $0xd0] sm:$0xff]
    %v104 = vld [vmem:[#allocation4 + $0xd8] sm:$0xff]
    %v105 = vld [vmem:[#allocation4 + $0xe0] sm:$0xff]
    %v106 = vld [vmem:[#allocation4 + $0xe8] sm:$0xff]
    %v107 = vld [vmem:[#allocation4 + $0xf0] sm:$0xff]
    %v108 = vld [vmem:[#allocation4 + $0xf8] sm:$0xff]
    %v109 = vld [vmem:[#allocation4 + $0x100] sm:$0xff]
    %v110 = vld [vmem:[#allocation4 + $0x108] sm:$0xff]
    %v111 = vld [vmem:[#allocation4 + $0x110] sm:$0xff]
    %v112 = vld [vmem:[#allocation4 + $0x118] sm:$0xff]
    %v113 = vld [vmem:[#allocation4 + $0x120] sm:$0xff]
    %v114 = vld [vmem:[#allocation4 + $0x128] sm:$0xff]
    %v115 = vld [vmem:[#allocation4 + $0x130] sm:$0xff]
    %v116 = vld [vmem:[#allocation4 + $0x138] sm:$0xff]
    %v117 = vld [vmem:[#allocation4 + $0x140] sm:$0xff]
    %v118 = vld [vmem:[#allocation4 + $0x148] sm:$0xff]
    %v119 = vld [vmem:[#allocation4 + $0x150] sm:$0xff]
    %v120 = vld [vmem:[#allocation4 + $0x158] sm:$0xff]
    %v121 = vld [vmem:[#allocation4 + $0x160] sm:$0xff]
    %v122 = vld [vmem:[#allocation4 + $0x168] sm:$0xff]
    %v123 = vld [vmem:[#allocation4 + $0x170] sm:$0xff]
    %v124 = vld [vmem:[#allocation4 + $0x178] sm:$0xff]
    %v125 = vld [vmem:[#allocation4 + $0x180] sm:$0xff]
    %v126 = vld [vmem:[#allocation4 + $0x188] sm:$0xff]
    %v127 = vld [vmem:[#allocation4 + $0x190] sm:$0xff]
    %v128 = vld [vmem:[#allocation4 + $0x198] sm:$0xff]
    %v129 = vld [vmem:[#allocation4 + $0x1a0] sm:$0xff]
    %v130 = vld [vmem:[#allocation4 + $0x1a8] sm:$0xff]
    %v131 = vld [vmem:[#allocation4 + $0x1b0] sm:$0xff]
    %v132 = vld [vmem:[#allocation4 + $0x1b8] sm:$0xff]
    %v133 = vld [vmem:[#allocation4 + $0x1c0] sm:$0xff]
    %v134 = vld [vmem:[#allocation4 + $0x1c8] sm:$0xff]
    %v135 = vld [vmem:[#allocation4 + $0x1d0] sm:$0xff]
    %v136 = vld [vmem:[#allocation4 + $0x1d8] sm:$0xff]
    %v137 = vld [vmem:[#allocation4 + $0x1e0] sm:$0xff]
    %v138 = vld [vmem:[#allocation4 + $0x1e8] sm:$0xff]
    %v139 = vld [vmem:[#allocation4 + $0x1f0] sm:$0xff]
    %v140 = vld [vmem:[#allocation4 + $0x1f8] sm:$0xff]
    %v141 = vld [vmem:[#allocation6] sm:$0xff]
    %v142 = vld [vmem:[#allocation6 + $0x8] sm:$0xff]
    %v143 = vld [vmem:[#allocation6 + $0x10] sm:$0xff]
    %v144 = vld [vmem:[#allocation6 + $0x18] sm:$0xff]
    %v145 = vld [vmem:[#allocation6 + $0x20] sm:$0xff]
    %v146 = vld [vmem:[#allocation6 + $0x28] sm:$0xff]
    %v147 = vld [vmem:[#allocation6 + $0x30] sm:$0xff]
    %v148 = vld [vmem:[#allocation6 + $0x38] sm:$0xff]
    %v149 = vld [vmem:[#allocation6 + $0x40] sm:$0xff]
    %v150 = vld [vmem:[#allocation6 + $0x48] sm:$0xff]
    %v151 = vld [vmem:[#allocation6 + $0x50] sm:$0xff]
    %v152 = vld [vmem:[#allocation6 + $0x58] sm:$0xff]
    %v153 = vld [vmem:[#allocation6 + $0x60] sm:$0xff]
    %v154 = vld [vmem:[#allocation6 + $0x68] sm:$0xff]
    %v155 = vld [vmem:[#allocation6 + $0x70] sm:$0xff]
    %v156 = vld [vmem:[#allocation6 + $0x78] sm:$0xff]
    %v157 = vld [vmem:[#allocation6 + $0x80] sm:$0xff]
    %v158 = vld [vmem:[#allocation6 + $0x88] sm:$0xff]
    %v159 = vld [vmem:[#allocation6 + $0x90] sm:$0xff]
    %v160 = vld [vmem:[#allocation6 + $0x98] sm:$0xff]
    %v161 = vld [vmem:[#allocation6 + $0xa0] sm:$0xff]
    %v162 = vld [vmem:[#allocation6 + $0xa8] sm:$0xff]
    %v163 = vld [vmem:[#allocation6 + $0xb0] sm:$0xff]
    %v164 = vld [vmem:[#allocation6 + $0xb8] sm:$0xff]
    %v165 = vld [vmem:[#allocation6 + $0xc0] sm:$0xff]
    %v166 = vld [vmem:[#allocation6 + $0xc8] sm:$0xff]
    %v167 = vld [vmem:[#allocation6 + $0xd0] sm:$0xff]
    %v168 = vld [vmem:[#allocation6 + $0xd8] sm:$0xff]
    %v169 = vld [vmem:[#allocation6 + $0xe0] sm:$0xff]
    %v170 = vld [vmem:[#allocation6 + $0xe8] sm:$0xff]
    %v171 = vld [vmem:[#allocation6 + $0xf0] sm:$0xff]
    %v172 = vld [vmem:[#allocation6 + $0xf8] sm:$0xff]
    %v173 = vld [vmem:[%s9] sm:$0x1]
    %v174 = vld [vmem:[%s4] sm:$0xff]
    %v175 = vld [vmem:[%s4 + $0x8] sm:$0xff]
    %v176 = vld [vmem:[%s4 + $0x10] sm:$0xff]
    %v177 = vld [vmem:[%s4 + $0x18] sm:$0xff]
    %v178 = vld [vmem:[%s0] sm:$0xff]
    %v179 = vld [vmem:[%s3] sm:$0xff]
    %v180 = vld [vmem:[%s3 + $0x8] sm:$0xff]
    %v181 = vld [vmem:[%s5] sm:$0x1]
    %v183 = vperm.slane %v181, 0
    %vm185 = vcmask 130048
    %v187 = vsel %vm185, %v178, 0
    %189 = vmatpush.msra.mxu0 0.0
    %190 = vmatpush.msra.mxu0 0.0
    %191 = vmatpush.msra.mxu0 0.0
    %192 = vmatpush.msra.mxu0 0.0
    %193 = vmatpush.msra.mxu0 0.0
    %194 = vmatpush.msra.mxu0 0.0
    %195 = vmatpush.msra.mxu0 0.0
    %196 = vmatpush.msra.mxu0 0.0
    %197 = vmatpush.msra.mxu0 0.0
    %198 = vmatpush.msra.mxu0 0.0
    %199 = vmatpush.msra.mxu0 0.0
    %200 = vmatpush.msra.mxu0 0.0
    %201 = vmatpush.msra.mxu0 0.0
    %202 = vmatpush.msra.mxu0 0.0
    %203 = vmatpush.msra.mxu0 %v180
    %204 = vmatpush.msra.mxu0 %v179
    %205 = vmatmul.f32.gmra.mxu0 %v187
    %v206 = vpop.f32.mrf.mxu0
    %v207 = vadd.f32 %v183, %v206
    %208 = vdwg.mxu0
    %v209 = vld [vmem:[#allocation2] sm:$0xff]
    %v210 = vld [vmem:[#allocation3] sm:$0xff]
    %vm211 = vcmask 261120
    %v213 = vsel %vm211, %v209, 0
    %215 = vmatpush.msra.mxu0 0.0
    %216 = vmatpush.msra.mxu0 0.0
    %217 = vmatpush.msra.mxu0 0.0
    %218 = vmatpush.msra.mxu0 0.0
    %219 = vmatpush.msra.mxu0 0.0
    %220 = vmatpush.msra.mxu0 0.0
    %221 = vmatpush.msra.mxu0 0.0
    %222 = vmatpush.msra.mxu0 0.0
    %223 = vmatpush.msra.mxu0 0.0
    %224 = vmatpush.msra.mxu0 0.0
    %225 = vmatpush.msra.mxu0 0.0
    %226 = vmatpush.msra.mxu0 0.0
    %227 = vmatpush.msra.mxu0 %v177
    %228 = vmatpush.msra.mxu0 %v176
    %229 = vmatpush.msra.mxu0 %v175
    %230 = vmatpush.msra.mxu0 %v174
    %231 = vmatmul.f32.gmra.mxu0 %v213
    %v232 = vpop.f32.mrf.mxu0
    %v233 = vadd.f32 0.0, %v232
    %234 = vdwg.mxu0
    %v235 = vadd.f32 %v207, %v233
    %v236 = vmul.f32 %v235, 0.5
    %v237 = vand.u32 2147483647, %v236
    %vm238 = vcmp.le.f32.partialorder %v237, 0.7853982
    %vm239 = vcmp.lt.s32.totalorder %v236, 0
    %v240 = vand.u32 %v236, 2139095040
    %v241 = vshrl.u32 %v240, 23
    %v242 = vsub.s32 %v241, 127
    %v243 = vand.u32 2147483647, %v236
    %v244 = vand.u32 %v243, 8388607
    %v245 = vor.u32 %v244, 8388608
    %v246 = vsub.s32 0, %v245
    %v247 = vadd.s32 %v242, 1
    %vm248 = vcmp.gt.s32.totalorder %v247, 0
    %v249 = vsel %vm248, %v247, 0
    %v250 = vshrl.u32 %v249, 5
    %v251 = vand.u32 %v249, 31
    %v252 = vsub.s32 32, %v251
    %v253 = vshrl.u32 683565275, %v252
    %v254 = vshll.u32 683565275, %v251
    %v255 = vshrl.u32 2475754826, %v252
    %v256 = vor.u32 %v254, %v255
    %v257 = vshll.u32 2475754826, %v251
    %v258 = vshrl.u32 2131351028, %v252
    %v259 = vor.u32 %v257, %v258
    %v260 = vshll.u32 2131351028, %v251
    %v261 = vshrl.u32 2102212464, %v252
    %v262 = vor.u32 %v260, %v261
    %v263 = vshll.u32 2102212464, %v251
    %v264 = vshrl.u32 920167782, %v252
    %v265 = vor.u32 %v263, %v264
    %v266 = vshll.u32 920167782, %v251
    %v267 = vshrl.u32 1326507024, %v252
    %v268 = vor.u32 %v266, %v267
    %vm269 = vcmp.lt.s32.totalorder %v250, 1
    %vm270 = vcmp.lt.s32.totalorder %v250, 2
    %vm271 = vcmp.lt.s32.totalorder %v250, 3
    %vm272 = vcmp.lt.s32.totalorder %v250, 4
    %v273 = vsel %vm269, %v253, %v256
    %v274 = vsel %vm272, %v262, 2102212464
    %v275 = vsel %vm271, %v259, %v274
    %v276 = vsel %vm270, %v273, %v275
    %v277 = vsel %vm269, %v256, %v259
    %v278 = vsel %vm272, %v265, 920167782
    %v279 = vsel %vm271, %v262, %v278
    %v280 = vsel %vm270, %v277, %v279
    %v281 = vsel %vm269, %v259, %v262
    %v282 = vsel %vm272, %v268, 1326507024
    %v283 = vsel %vm271, %v265, %v282
    %v284 = vsel %vm270, %v281, %v283
    %v285 = vshll.u32 %v245, 8
    %v286 = vand.u32 %v285, 65535
    %v287 = vshrl.u32 %v285, 16
    %v288 = vand.u32 %v284, 65535
    %v289 = vshrl.u32 %v284, 16
    %v290 = vmul.u32 %v286, %v288
    %v291 = vmul.u32 %v286, %v289
    %v292 = vmul.u32 %v287, %v288
    %v293 = vmul.u32 %v287, %v289
    %v294 = vshll.u32 %v291, 16
    %v295 = vshrl.u32 %v291, 16
    %v296 = vshll.u32 %v292, 16
    %v297 = vshrl.u32 %v292, 16
    %vm298 = vc.u32 %v290, %v294
    %v299 = vsel %vm298, 1, 0
    %v300 = vadd.s32 %v290, %v294
    %v301 = vadd.s32 %v293, %v299
    %vm302 = vc.u32 %v300, %v296
    %v303 = vsel %vm302, 1, 0
    %v304 = vadd.s32 %v300, %v296
    %v305 = vadd.s32 %v301, %v303
    %v306 = vadd.s32 %v305, %v295
    %v307 = vadd.s32 %v306, %v297
    %v308 = vand.u32 %v285, 65535
    %v309 = vshrl.u32 %v285, 16
    %v310 = vand.u32 %v280, 65535
    %v311 = vshrl.u32 %v280, 16
    %v312 = vmul.u32 %v308, %v310
    %v313 = vmul.u32 %v308, %v311
    %v314 = vmul.u32 %v309, %v310
    %v315 = vmul.u32 %v309, %v311
    %v316 = vshll.u32 %v313, 16
    %v317 = vshrl.u32 %v313, 16
    %v318 = vshll.u32 %v314, 16
    %v319 = vshrl.u32 %v314, 16
    %vm320 = vc.u32 %v312, %v316
    %v321 = vsel %vm320, 1, 0
    %v322 = vadd.s32 %v312, %v316
    %v323 = vadd.s32 %v315, %v321
    %vm324 = vc.u32 %v322, %v318
    %v325 = vsel %vm324, 1, 0
    %v326 = vadd.s32 %v322, %v318
    %v327 = vadd.s32 %v323, %v325
    %v328 = vadd.s32 %v327, %v317
    %v329 = vadd.s32 %v328, %v319
    %v330 = vmul.u32 %v285, %v276
    %v331 = vadd.s32 %v307, %v326
    %vm332 = vc.u32 %v307, %v326
    %v333 = vadd.s32 %v329, 1
    %v334 = vsel %vm332, %v333, %v329
    %v335 = vadd.s32 %v330, %v334
    %v336 = vadd.s32 %v335, 536870912
    %v337 = vshrl.u32 %v336, 30
    %v338 = vshll.u32 %v337, 30
    %v339 = vsub.s32 %v335, %v338
    %vm340 = vcmp.lt.s32.totalorder %v339, 0
    %v341 = vsub.s32 0, %v339
    %v342 = vsel %vm340, %v341, %v339
    %v343 = vclz %v342
    %v344 = vsub.s32 %v343, 2
    %vm345 = vcmp.gt.s32.totalorder 0, %v344
    %v346 = vsel %vm345, 0, %v344
    %v347 = vsub.s32 32, %v346
    %v348 = vshll.u32 %v339, %v346
    %v349 = vshrl.u32 %v331, %v347
    %v350 = vor.u32 %v348, %v349
    %v351 = vsub.s32 4294967266, %v346
    %v352 = vadd.s32 %v351, 127
    %v353 = vshll.u32 %v352, 23
    %v354 = vor.u32 4788187, %v353
    %v355 = vand.u32 2147483647, %v354
    %v357 = vcvt.s32.f32 %v350
    %v358 = vmul.f32 %v357, %v355
    %v359 = vxor.u32 %v358, 2147483648
    %v360 = vsel %vm239, %v359, %v358
    %v361 = vsub.s32 4, %v337
    %v362 = vsel %vm239, %v361, %v337
    %v363 = vsel %vm238, %v236, %v360
    %v364 = vsel %vm238, 0, %v362
    %v365 = vmul.f32 %v363, %v363
    %v366 = vmul.f32 %v365, -0.001358992
    %v367 = vadd.f32 %v366, 0.041655596
    %v368 = vmul.f32 %v365, %v367
    %v369 = vadd.f32 %v368, -0.4999988
    %v370 = vmul.f32 %v365, %v369
    %v371 = vadd.f32 1.0, %v370
    %v372 = vmul.f32 %v363, %v363
    %v373 = vmul.f32 %v372, -0.00019511016
    %v374 = vadd.f32 %v373, 0.008332121
    %v375 = vmul.f32 %v372, %v374
    %v376 = vadd.f32 %v375, -0.16666654
    %v377 = vmul.f32 %v372, %v376
    %v378 = vadd.f32 %v377, 1.0
    %v379 = vmul.f32 %v378, %v363
    %vm380 = vweird.f32 %v236
    %v381 = vand.u32 %v364, 3
    %vm382 = vcmp.lt.s32.totalorder %v381, 2
    %vm383 = vcmp.eq.s32.totalorder %v381, 0
    %v384 = vxor.u32 %v379, 2147483648
    %v385 = vsel %vm383, %v371, %v384
    %vm386 = vcmp.eq.s32.totalorder %v381, 2
    %v387 = vxor.u32 %v371, 2147483648
    %v388 = vsel %vm386, %v387, %v379
    %v389 = vsel %vm382, %v385, %v388
    %v390 = vsel %vm380, nan, %v389
    %v391 = vand.u32 2147483647, %v236
    %vm392 = vcmp.le.f32.partialorder %v391, 0.7853982
    %vm393 = vcmp.lt.s32.totalorder %v236, 0
    %v394 = vand.u32 %v236, 2139095040
    %v395 = vshrl.u32 %v394, 23
    %v396 = vsub.s32 %v395, 127
    %v397 = vand.u32 2147483647, %v236
    %v398 = vand.u32 %v397, 8388607
    %v399 = vor.u32 %v398, 8388608
    %v400 = vsub.s32 0, %v399
    %v401 = vadd.s32 %v396, 1
    %vm402 = vcmp.gt.s32.totalorder %v401, 0
    %v403 = vsel %vm402, %v401, 0
    %v404 = vshrl.u32 %v403, 5
    %v405 = vand.u32 %v403, 31
    %v406 = vsub.s32 32, %v405
    %v407 = vshrl.u32 683565275, %v406
    %v408 = vshll.u32 683565275, %v405
    %v409 = vshrl.u32 2475754826, %v406
    %v410 = vor.u32 %v408, %v409
    %v411 = vshll.u32 2475754826, %v405
    %v412 = vshrl.u32 2131351028, %v406
    %v413 = vor.u32 %v411, %v412
    %v414 = vshll.u32 2131351028, %v405
    %v415 = vshrl.u32 2102212464, %v406
    %v416 = vor.u32 %v414, %v415
    %v417 = vshll.u32 2102212464, %v405
    %v418 = vshrl.u32 920167782, %v406
    %v419 = vor.u32 %v417, %v418
    %v420 = vshll.u32 920167782, %v405
    %v421 = vshrl.u32 1326507024, %v406
    %v422 = vor.u32 %v420, %v421
    %vm423 = vcmp.lt.s32.totalorder %v404, 1
    %vm424 = vcmp.lt.s32.totalorder %v404, 2
    %vm425 = vcmp.lt.s32.totalorder %v404, 3
    %vm426 = vcmp.lt.s32.totalorder %v404, 4
    %v427 = vsel %vm423, %v407, %v410
    %v428 = vsel %vm426, %v416, 2102212464
    %v429 = vsel %vm425, %v413, %v428
    %v430 = vsel %vm424, %v427, %v429
    %v431 = vsel %vm423, %v410, %v413
    %v432 = vsel %vm426, %v419, 920167782
    %v433 = vsel %vm425, %v416, %v432
    %v434 = vsel %vm424, %v431, %v433
    %v435 = vsel %vm423, %v413, %v416
    %v436 = vsel %vm426, %v422, 1326507024
    %v437 = vsel %vm425, %v419, %v436
    %v438 = vsel %vm424, %v435, %v437
    %v439 = vshll.u32 %v399, 8
    %v440 = vand.u32 %v439, 65535
    %v441 = vshrl.u32 %v439, 16
    %v442 = vand.u32 %v438, 65535
    %v443 = vshrl.u32 %v438, 16
    %v444 = vmul.u32 %v440, %v442
    %v445 = vmul.u32 %v440, %v443
    %v446 = vmul.u32 %v441, %v442
    %v447 = vmul.u32 %v441, %v443
    %v448 = vshll.u32 %v445, 16
    %v449 = vshrl.u32 %v445, 16
    %v450 = vshll.u32 %v446, 16
    %v451 = vshrl.u32 %v446, 16
    %vm452 = vc.u32 %v444, %v448
    %v453 = vsel %vm452, 1, 0
    %v454 = vadd.s32 %v444, %v448
    %v455 = vadd.s32 %v447, %v453
    %vm456 = vc.u32 %v454, %v450
    %v457 = vsel %vm456, 1, 0
    %v458 = vadd.s32 %v454, %v450
    %v459 = vadd.s32 %v455, %v457
    %v460 = vadd.s32 %v459, %v449
    %v461 = vadd.s32 %v460, %v451
    %v462 = vand.u32 %v439, 65535
    %v463 = vshrl.u32 %v439, 16
    %v464 = vand.u32 %v434, 65535
    %v465 = vshrl.u32 %v434, 16
    %v466 = vmul.u32 %v462, %v464
    %v467 = vmul.u32 %v462, %v465
    %v468 = vmul.u32 %v463, %v464
    %v469 = vmul.u32 %v463, %v465
    %v470 = vshll.u32 %v467, 16
    %v471 = vshrl.u32 %v467, 16
    %v472 = vshll.u32 %v468, 16
    %v473 = vshrl.u32 %v468, 16
    %vm474 = vc.u32 %v466, %v470
    %v475 = vsel %vm474, 1, 0
    %v476 = vadd.s32 %v466, %v470
    %v477 = vadd.s32 %v469, %v475
    %vm478 = vc.u32 %v476, %v472
    %v479 = vsel %vm478, 1, 0
    %v480 = vadd.s32 %v476, %v472
    %v481 = vadd.s32 %v477, %v479
    %v482 = vadd.s32 %v481, %v471
    %v483 = vadd.s32 %v482, %v473
    %v484 = vmul.u32 %v439, %v430
    %v485 = vadd.s32 %v461, %v480
    %vm486 = vc.u32 %v461, %v480
    %v487 = vadd.s32 %v483, 1
    %v488 = vsel %vm486, %v487, %v483
    %v489 = vadd.s32 %v484, %v488
    %v490 = vadd.s32 %v489, 536870912
    %v491 = vshrl.u32 %v490, 30
    %v492 = vshll.u32 %v491, 30
    %v493 = vsub.s32 %v489, %v492
    %vm494 = vcmp.lt.s32.totalorder %v493, 0
    %v495 = vsub.s32 0, %v493
    %v496 = vsel %vm494, %v495, %v493
    %v497 = vclz %v496
    %v498 = vsub.s32 %v497, 2
    %vm499 = vcmp.gt.s32.totalorder 0, %v498
    %v500 = vsel %vm499, 0, %v498
    %v501 = vsub.s32 32, %v500
    %v502 = vshll.u32 %v493, %v500
    %v503 = vshrl.u32 %v485, %v501
    %v504 = vor.u32 %v502, %v503
    %v505 = vsub.s32 4294967266, %v500
    %v506 = vadd.s32 %v505, 127
    %v507 = vshll.u32 %v506, 23
    %v508 = vor.u32 4788187, %v507
    %v509 = vand.u32 2147483647, %v508
    %v511 = vcvt.s32.f32 %v504
    %v512 = vmul.f32 %v511, %v509
    %v513 = vxor.u32 %v512, 2147483648
    %v514 = vsel %vm393, %v513, %v512
    %v515 = vsub.s32 4, %v491
    %v516 = vsel %vm393, %v515, %v491
    %v517 = vsel %vm392, %v236, %v514
    %v518 = vsel %vm392, 0, %v516
    %v519 = vmul.f32 %v517, %v517
    %v520 = vmul.f32 %v519, -0.001358992
    %v521 = vadd.f32 %v520, 0.041655596
    %v522 = vmul.f32 %v519, %v521
    %v523 = vadd.f32 %v522, -0.4999988
    %v524 = vmul.f32 %v519, %v523
    %v525 = vadd.f32 1.0, %v524
    %v526 = vmul.f32 %v517, %v517
    %v527 = vmul.f32 %v526, -0.00019511016
    %v528 = vadd.f32 %v527, 0.008332121
    %v529 = vmul.f32 %v526, %v528
    %v530 = vadd.f32 %v529, -0.16666654
    %v531 = vmul.f32 %v526, %v530
    %v532 = vadd.f32 %v531, 1.0
    %v533 = vmul.f32 %v532, %v517
    %vm534 = vweird.f32 %v236
    %v535 = vadd.s32 %v518, 3
    %v536 = vand.u32 %v535, 3
    %vm537 = vcmp.lt.s32.totalorder %v536, 2
    %vm538 = vcmp.eq.s32.totalorder %v536, 0
    %v539 = vxor.u32 %v533, 2147483648
    %v540 = vsel %vm538, %v525, %v539
    %vm541 = vcmp.eq.s32.totalorder %v536, 2
    %v542 = vxor.u32 %v525, 2147483648
    %v543 = vsel %vm541, %v542, %v533
    %v544 = vsel %vm537, %v540, %v543
    %v545 = vsel %vm534, nan, %v544
    %v546 = vsub.f32 %v545, %v390
    %v548 = vperm.slane %v76, 0
    %v549 = vperm.slane %v76, 4
    %v552 = vperm.slane %v548, 0
    %v553 = vperm.slane %v549, 0
    %555 = vset.pattern.permute.xlu0 0
    %556 = vperm.xlu0 %555, %v546
    %v557 = vpop.permute.xlu0 %556
    %v559 = vmul.f32 %v552, %v557
    %v560 = vmul.f32 %v553, %v557
    %562 = vset.pattern.permute.xlu0 0
    %563 = vperm.xlu0 %562, %v390
    %v564 = vpop.permute.xlu0 %563
    %v566 = vadd.f32 %v564, %v559
    %v567 = vadd.f32 %v564, %v560
    %v568 = vperm.slane %v76, 1
    %v569 = vperm.slane %v76, 5
    %v572 = vperm.slane %v568, 1
    %v573 = vperm.slane %v569, 1
    %574 = vset.pattern.permute.xlu0 1
    %575 = vperm.xlu0 %574, %v546
    %v576 = vpop.permute.xlu0 %575
    %v578 = vmul.f32 %v572, %v576
    %v579 = vmul.f32 %v573, %v576
    %580 = vset.pattern.permute.xlu0 1
    %581 = vperm.xlu0 %580, %v390
    %v582 = vpop.permute.xlu0 %581
    %v584 = vadd.f32 %v582, %v578
    %v585 = vadd.f32 %v582, %v579
    %v586 = vmul.f32 %v566, %v584
    %v587 = vmul.f32 %v567, %v585
    %v588 = vperm.slane %v76, 2
    %v589 = vperm.slane %v76, 6
    %v592 = vperm.slane %v588, 2
    %v593 = vperm.slane %v589, 2
    %594 = vset.pattern.permute.xlu0 2
    %595 = vperm.xlu0 %594, %v546
    %v596 = vpop.permute.xlu0 %595
    %v598 = vmul.f32 %v592, %v596
    %v599 = vmul.f32 %v593, %v596
    %600 = vset.pattern.permute.xlu0 2
    %601 = vperm.xlu0 %600, %v390
    %v602 = vpop.permute.xlu0 %601
    %v604 = vadd.f32 %v602, %v598
    %v605 = vadd.f32 %v602, %v599
    %v606 = vmul.f32 %v586, %v604
    %v607 = vmul.f32 %v587, %v605
    %v608 = vperm.slane %v76, 3
    %v609 = vperm.slane %v76, 7
    %v612 = vperm.slane %v608, 3
    %v613 = vperm.slane %v609, 3
    %614 = vset.pattern.permute.xlu0 3
    %615 = vperm.xlu0 %614, %v546
    %v616 = vpop.permute.xlu0 %615
    %v618 = vmul.f32 %v612, %v616
    %v619 = vmul.f32 %v613, %v616
    %620 = vset.pattern.permute.xlu0 3
    %621 = vperm.xlu0 %620, %v390
    %v622 = vpop.permute.xlu0 %621
    %v624 = vadd.f32 %v622, %v618
    %v625 = vadd.f32 %v622, %v619
    %v626 = vmul.f32 %v606, %v624
    %v627 = vmul.f32 %v607, %v625
    %628 = vmatpush.msra.mxu0 %v107
    %629 = vmatpush.msra.mxu0 %v105
    %630 = vmatpush.msra.mxu0 %v103
    %631 = vmatpush.msra.mxu0 %v101
    %632 = vmatpush.msra.mxu0 %v99
    %633 = vmatpush.msra.mxu0 %v97
    %634 = vmatpush.msra.mxu0 %v95
    %635 = vmatpush.msra.mxu0 %v93
    %636 = vmatpush.msra.mxu0 %v91
    %637 = vmatpush.msra.mxu0 %v89
    %638 = vmatpush.msra.mxu0 %v87
    %639 = vmatpush.msra.mxu0 %v85
    %640 = vmatpush.msra.mxu0 %v83
    %641 = vmatpush.msra.mxu0 %v81
    %642 = vmatpush.msra.mxu0 %v79
    %643 = vmatpush.msra.mxu0 %v77
    %644 = vmatmul.f32.gmra.mxu0 %v626
    %v645 = vpop.f32.mrf.mxu0
    %v646 = vadd.f32 0.0, %v645
    %647 = vdwg.mxu0
    %648 = vmatpush.msra.mxu0 %v139
    %649 = vmatpush.msra.mxu0 %v137
    %650 = vmatpush.msra.mxu0 %v135
    %651 = vmatpush.msra.mxu0 %v133
    %652 = vmatpush.msra.mxu0 %v131
    %653 = vmatpush.msra.mxu0 %v129
    %654 = vmatpush.msra.mxu0 %v127
    %655 = vmatpush.msra.mxu0 %v125
    %656 = vmatpush.msra.mxu0 %v123
    %657 = vmatpush.msra.mxu0 %v121
    %658 = vmatpush.msra.mxu0 %v119
    %659 = vmatpush.msra.mxu0 %v117
    %660 = vmatpush.msra.mxu0 %v115
    %661 = vmatpush.msra.mxu0 %v113
    %662 = vmatpush.msra.mxu0 %v111
    %663 = vmatpush.msra.mxu0 %v109
    %664 = vmatmul.f32.gmra.mxu0 %v627
    %v665 = vpop.f32.mrf.mxu0
    %v666 = vadd.f32 %v646, %v665
    %667 = vdwg.mxu0
    %668 = vmatpush.msra.mxu0 %v108
    %669 = vmatpush.msra.mxu0 %v106
    %670 = vmatpush.msra.mxu0 %v104
    %671 = vmatpush.msra.mxu0 %v102
    %672 = vmatpush.msra.mxu0 %v100
    %673 = vmatpush.msra.mxu0 %v98
    %674 = vmatpush.msra.mxu0 %v96
    %675 = vmatpush.msra.mxu0 %v94
    %676 = vmatpush.msra.mxu0 %v92
    %677 = vmatpush.msra.mxu0 %v90
    %678 = vmatpush.msra.mxu0 %v88
    %679 = vmatpush.msra.mxu0 %v86
    %680 = vmatpush.msra.mxu0 %v84
    %681 = vmatpush.msra.mxu0 %v82
    %682 = vmatpush.msra.mxu0 %v80
    %683 = vmatpush.msra.mxu0 %v78
    %684 = vmatmul.f32.gmra.mxu0 %v626
    %v685 = vpop.f32.mrf.mxu0
    %v686 = vadd.f32 0.0, %v685
    %687 = vdwg.mxu0
    %688 = vmatpush.msra.mxu0 %v140
    %689 = vmatpush.msra.mxu0 %v138
    %690 = vmatpush.msra.mxu0 %v136
    %691 = vmatpush.msra.mxu0 %v134
    %692 = vmatpush.msra.mxu0 %v132
    %693 = vmatpush.msra.mxu0 %v130
    %694 = vmatpush.msra.mxu0 %v128
    %695 = vmatpush.msra.mxu0 %v126
    %696 = vmatpush.msra.mxu0 %v124
    %697 = vmatpush.msra.mxu0 %v122
    %698 = vmatpush.msra.mxu0 %v120
    %699 = vmatpush.msra.mxu0 %v118
    %700 = vmatpush.msra.mxu0 %v116
    %701 = vmatpush.msra.mxu0 %v114
    %702 = vmatpush.msra.mxu0 %v112
    %703 = vmatpush.msra.mxu0 %v110
    %704 = vmatmul.f32.gmra.mxu0 %v627
    %v705 = vpop.f32.mrf.mxu0
    %v706 = vadd.f32 %v686, %v705
    %707 = vdwg.mxu0
    %v708 = vmul.f32 %v626, %v666
    %v709 = vmul.f32 %v627, %v706
    %v711 = vperm.slane %v173, 0
    %713 = vmatpush.msra.mxu0 %v156
    %714 = vmatpush.msra.mxu0 %v155
    %715 = vmatpush.msra.mxu0 %v154
    %716 = vmatpush.msra.mxu0 %v153
    %717 = vmatpush.msra.mxu0 %v152
    %718 = vmatpush.msra.mxu0 %v151
    %719 = vmatpush.msra.mxu0 %v150
    %720 = vmatpush.msra.mxu0 %v149
    %721 = vmatpush.msra.mxu0 %v148
    %722 = vmatpush.msra.mxu0 %v147
    %723 = vmatpush.msra.mxu0 %v146
    %724 = vmatpush.msra.mxu0 %v145
    %725 = vmatpush.msra.mxu0 %v144
    %726 = vmatpush.msra.mxu0 %v143
    %727 = vmatpush.msra.mxu0 %v142
    %728 = vmatpush.msra.mxu0 %v141
    %729 = vmatmul.f32.gmra.mxu0 %v708
    %v730 = vpop.f32.mrf.mxu0
    %v731 = vadd.f32 %v711, %v730
    %732 = vdwg.mxu0
    %733 = vmatpush.msra.mxu0 %v172
    %734 = vmatpush.msra.mxu0 %v171
    %735 = vmatpush.msra.mxu0 %v170
    %736 = vmatpush.msra.mxu0 %v169
    %737 = vmatpush.msra.mxu0 %v168
    %738 = vmatpush.msra.mxu0 %v167
    %739 = vmatpush.msra.mxu0 %v166
    %740 = vmatpush.msra.mxu0 %v165
    %741 = vmatpush.msra.mxu0 %v164
    %742 = vmatpush.msra.mxu0 %v163
    %743 = vmatpush.msra.mxu0 %v162
    %744 = vmatpush.msra.mxu0 %v161
    %745 = vmatpush.msra.mxu0 %v160
    %746 = vmatpush.msra.mxu0 %v159
    %747 = vmatpush.msra.mxu0 %v158
    %748 = vmatpush.msra.mxu0 %v157
    %749 = vmatmul.f32.gmra.mxu0 %v709
    %v750 = vpop.f32.mrf.mxu0
    %v751 = vadd.f32 %v731, %v750
    %752 = vdwg.mxu0
    %v753 = vsub.f32 0.0, %v751
    %v754 = vmul.f32 %v753, 1.442695
    %v755 = vpow.pop %v754
    %v756 = vadd.f32 %v755, 1.0
    %v757 = vrcp.pop %v756
    %v758 = vtanh.pop %v751
    %760 = vrot.lane.b32.xlu0 %v757, 96
    %v761 = vpop.permute.xlu0 %760
    %v763 = vmul.f32 %v210, %v761
    %765 = vrot.lane.b32.xlu0 %v758, 64
    %v766 = vpop.permute.xlu0 %765
    %v768 = vmul.f32 %v757, %v766
    %v769 = vadd.f32 %v763, %v768
    %v770 = vtanh.pop %v769
    %772 = vrot.lane.b32.xlu0 %v770, 96
    %v773 = vpop.permute.xlu0 %772
    %v775 = vmul.f32 %v757, %v773
    %777 = vrot.lane.b32.xlu0 %v775, 32
    %v778 = vpop.permute.xlu0 %777
    %780 = vst.msk [vmem:[%s10] sm:$0xff] %vm211, %v778
    %782 = vrot.lane.b32.xlu0 %v769, 32
    %v783 = vpop.permute.xlu0 %782
    %vm785 = vcmask 523520
    %786 = vst.msk [vmem:[%s10] sm:$0xff] %vm785, %v783
    %787 = vst.msk [vmem:[#allocation2] sm:$0xff] %vm211, %v778
    %788 = vst.msk [vmem:[#allocation3] sm:$0xff] %vm211, %v769
    // Predicated region
    $region54: #{qlstm_sequence_forward.1} parent=1 // pred_check
      _
    $region55: #{qlstm_sequence_forward.1} parent=1 // pred_check_branch
      %790 = sbr.rel (0) target = $region57
    $region56: #{qlstm_sequence_forward.1} parent=1 // pred_region
      _
    $region57: #{qlstm_sequence_forward.1} parent=1 // pred_fallthru
      _
    // Predicated region
    $region58: #{qlstm_sequence_forward.1} parent=1 // pred_check
      _
    $region59: #{qlstm_sequence_forward.1} parent=1 // pred_check_branch
      %792 = sbr.rel (0) target = $region61
    $region60: #{qlstm_sequence_forward.1} parent=1 // pred_region
      _
    $region61: #{qlstm_sequence_forward.1} parent=1 // pred_fallthru
      _
    %793 = vsyncpa [#allocation5], 1
    %794 = vsyncpa [#allocation7], 1

</llo_original>
